<compile_context>
chip_gen: v5e
topology: v5e:2x2
jax: 0.10.0
libtpu: 0.0.40
codegen_flags: <defaults>
</compile_context>

<pallas_src>
import functools
import math

import jax
import jax.numpy as jnp
from jax.experimental import pallas as pl
from jax.experimental.pallas import tpu as pltpu


def _graph_attention_kernel(node_feat_ref, dist_ref,
                            src_idx_ref, dst_idx_col_ref, dst_idx_row_ref,
                            w_node_ref, w_dist_ref, out_ref, *, logit_col):
    f32 = jnp.float32
    E = dist_ref.shape[0]
    num_nodes = node_feat_ref.shape[0]
    num_dst = out_ref.shape[0]
    num_src = num_nodes - num_dst
    n_pad = out_ref.shape[1]                  # 128-lane padded (dst_F + 1)

    src_idx = src_idx_ref[...]                # (E, 1) i32
    dst_idx_col = dst_idx_col_ref[...]        # (E, 1) i32
    dst_idx_row = dst_idx_row_ref[...]        # (1, E) i32

    # --- node projections: one MXU pass covers src AND dst nodes (block-stacked
    #     features / weights).  Fused weight layout: columns [0, logit_col) =
    #     edge_embed, column logit_col = edge_attention logit, rest zero.
    node_proj = jnp.dot(node_feat_ref[...], w_node_ref[...],
                        preferred_element_type=f32)           # (num_nodes, n_pad)

    # --- "two-hot" gather matrix: picks the src row and the (offset) dst row
    #     of each edge.  Pure VPU iota + compare, no cross-lane moves.
    node_iota = jax.lax.broadcasted_iota(jnp.int32, (E, num_nodes), 1)
    twohot = jnp.logical_or(node_iota == src_idx,
                            node_iota == dst_idx_col + num_src).astype(f32)

    member_ed = (jax.lax.broadcasted_iota(jnp.int32, (E, num_dst), 1)
                 == dst_idx_col)                              # (E, num_dst) bool

    # --- fused edge features * fused weights (embed columns + logit column)
    #     twohot @ node_proj == src_proj[src_idx] + dst_proj[dst_idx]
    fused = (jnp.dot(twohot, node_proj, preferred_element_type=f32)
             + jnp.dot(dist_ref[...], w_dist_ref[...],
                       preferred_element_type=f32))           # (E, n_pad)

    # --- attention logits: fused Linear column + LeakyReLU(0.2)
    logits = fused[:, logit_col:logit_col + 1]                # (E, 1)
    logits = jnp.where(logits >= 0.0, logits, 0.2 * logits)

    # --- scatter-softmax numerator (finite sentinel: empty dst groups are safe)
    neg_big = f32(-1e30)
    group_max = jnp.max(jnp.where(member_ed, logits, neg_big),
                        axis=0, keepdims=True)                # (1, num_dst)
    edge_max = jnp.max(jnp.where(member_ed, group_max, neg_big),
                       axis=1, keepdims=True)                 # (E, 1) masked gather
    exp_l = jnp.exp(logits - edge_max)                        # (E, 1)

    # --- payload: columns [0, logit_col) = exp * embed, column logit_col = exp
    lane = jax.lax.broadcasted_iota(jnp.int32, (E, n_pad), 1)
    payload = exp_l * jnp.where(lane == logit_col, 1.0, fused)  # (E, n_pad)

    # --- scatter-add: one lane-dense MXU matmul, no transposed contraction
    onehot_de = (jax.lax.broadcasted_iota(jnp.int32, (num_dst, E), 0)
                 == dst_idx_row).astype(f32)                  # (num_dst, E)
    out_full = jnp.dot(onehot_de, payload,
                       preferred_element_type=f32)            # (num_dst, n_pad)

    # --- divide numerator by folded denominator (guard empty groups), ReLU
    denom = out_full[:, logit_col:logit_col + 1]              # (num_dst, 1)
    denom = jnp.where(denom > 0.0, denom, 1.0)
    out_ref[...] = jnp.maximum(out_full / denom, 0.0)


def _round_up(x, m):
    return ((x + m - 1) // m) * m


def graph_attention_forward_batched(src_node_features, edge_src_idx,
                                    dst_node_features, edge_dst_idx,
                                    edge_dist_rel, w_att, w_emb):
    """Batched forward: leading axis B on per-graph arrays, shared weights.

    src_node_features (B, num_src, src_F) f32
    edge_src_idx      (B, E)              i32
    dst_node_features (B, num_dst, dst_F) f32
    edge_dst_idx      (B, E)              i32
    edge_dist_rel     (B, E, 2)           f32
    w_att             (F_in, 1)    f32, y = x @ w_att   (F_in = src_F + 2 + dst_F)
    w_emb             (F_in, dst_F) f32, y = x @ w_emb
    returns           (B, num_dst, dst_F) f32
    """
    B, num_src, src_f = src_node_features.shape
    _, num_dst, dst_f = dst_node_features.shape
    E = edge_dst_idx.shape[1]
    f_in = src_f + 2 + dst_f
    assert w_att.shape == (f_in, 1) and w_emb.shape == (f_in, dst_f)

    n_pad = _round_up(dst_f + 1, 128)
    f_node = src_f + dst_f
    num_nodes = num_src + num_dst

    # Fused weight: embed columns first, attention-logit column at index dst_f,
    # zero-padded to a lane-dense width, then split by edge-feature segment.
    w_fused = jnp.concatenate([w_emb, w_att], axis=1).astype(jnp.float32)
    w_fused = jnp.pad(w_fused, ((0, 0), (0, n_pad - (dst_f + 1))))
    w_node = jnp.concatenate([w_fused[:src_f], w_fused[src_f + 2:]],
                             axis=0)                                  # (f_node, n_pad)
    w_dist = jnp.pad(w_fused[src_f:src_f + 2], ((0, 6), (0, 0)))      # (8, n_pad)

    # Block-stacked node features (layout plumbing only): rows [0, num_src)
    # carry src features in columns [0, src_F); rows [num_src, num_nodes) carry
    # dst features in columns [src_F, f_node); everything else zero.
    node_feat = jnp.concatenate([
        jnp.pad(src_node_features.astype(jnp.float32),
                ((0, 0), (0, 0), (0, dst_f))),
        jnp.pad(dst_node_features.astype(jnp.float32),
                ((0, 0), (0, 0), (src_f, 0))),
    ], axis=1)                                                        # (B, num_nodes, f_node)

    dist_pad = jnp.pad(edge_dist_rel.astype(jnp.float32),
                       ((0, 0), (0, 0), (0, 6)))                      # (B, E, 8)
    src_idx_col = edge_src_idx.astype(jnp.int32).reshape(B, E, 1)
    dst_idx_col = edge_dst_idx.astype(jnp.int32).reshape(B, E, 1)
    dst_idx_row = edge_dst_idx.astype(jnp.int32).reshape(B, 1, E)

    kernel = functools.partial(_graph_attention_kernel, logit_col=dst_f)

    out = pl.pallas_call(
        kernel,
        out_shape=jax.ShapeDtypeStruct((B, num_dst, n_pad), jnp.float32),
        grid=(B,),
        in_specs=[
            pl.BlockSpec((None, num_nodes, f_node), lambda b: (b, 0, 0)),
            pl.BlockSpec((None, E, 8), lambda b: (b, 0, 0)),
            pl.BlockSpec((None, E, 1), lambda b: (b, 0, 0)),
            pl.BlockSpec((None, E, 1), lambda b: (b, 0, 0)),
            pl.BlockSpec((None, 1, E), lambda b: (b, 0, 0)),
            pl.BlockSpec((f_node, n_pad), lambda b: (0, 0)),
            pl.BlockSpec((8, n_pad), lambda b: (0, 0)),
        ],
        out_specs=pl.BlockSpec((None, num_dst, n_pad), lambda b: (b, 0, 0)),
        compiler_params=pltpu.CompilerParams(
            dimension_semantics=("parallel",)),
    )(node_feat, dist_pad, src_idx_col, dst_idx_col, dst_idx_row,
      w_node, w_dist)

    return out[:, :, :dst_f]


def graph_attention_forward(src_node_features, edge_src_idx, dst_node_features,
                            edge_dst_idx, edge_dist_rel, w_att, w_emb):
    """Single-graph entry point matching the PyTorch module signature."""
    out = graph_attention_forward_batched(
        src_node_features[None], edge_src_idx[None], dst_node_features[None],
        edge_dst_idx[None], edge_dist_rel[None], w_att, w_emb)
    return out[0]


def _reference(src_feat, src_idx, dst_feat, dst_idx, dist, w_att, w_emb):
    """Pure-JAX reference of the PyTorch forward (eval mode)."""
    x = jnp.concatenate([src_feat[src_idx], dist, dst_feat[dst_idx]], axis=-1)
    logit = x @ w_att[:, 0]
    logit = jnp.where(logit >= 0.0, logit, 0.2 * logit)
    num_dst = dst_feat.shape[0]
    gmax = jax.ops.segment_max(logit, dst_idx, num_segments=num_dst)
    e = jnp.exp(logit - gmax[dst_idx])
    gsum = jax.ops.segment_sum(e, dst_idx, num_segments=num_dst)
    att = e / gsum[dst_idx]
    emb = x @ w_emb
    out = jax.ops.segment_sum(att[:, None] * emb, dst_idx, num_segments=num_dst)
    return jax.nn.relu(out)


if __name__ == "__main__":
    B = 2
    num_src, num_dst = 24, 16
    src_f, dst_f = 16, 32
    num_edges = 64
    f_in = src_f + 2 + dst_f                                        # 50

    key = jax.random.PRNGKey(0)
    k_src, k_dst, k_dist, k_si, k_di, k_wa, k_we = jax.random.split(key, 7)

    src_feats = jax.random.normal(k_src, (B, num_src, src_f), jnp.float32)
    dst_feats = jax.random.normal(k_dst, (B, num_dst, dst_f), jnp.float32)
    dists = jax.random.normal(k_dist, (B, num_edges, 2), jnp.float32)
    src_idx = jax.random.randint(k_si, (B, num_edges), 0, num_src, jnp.int32)
    dst_idx = jax.random.randint(k_di, (B, num_edges), 0, num_dst, jnp.int32)

    # deterministic parameter init (nn.Linear shapes, stored transposed: y = x @ W)
    bound = 1.0 / math.sqrt(f_in)
    w_att = jax.random.uniform(k_wa, (f_in, 1), jnp.float32, -bound, bound)
    w_emb = jax.random.uniform(k_we, (f_in, dst_f), jnp.float32, -bound, bound)

    out = graph_attention_forward_batched(src_feats, src_idx, dst_feats,
                                          dst_idx, dists, w_att, w_emb)
    out = jax.block_until_ready(out)
    assert out.shape == (B, num_dst, dst_f)

    for b in range(B):
        ref = _reference(src_feats[b], src_idx[b], dst_feats[b], dst_idx[b],
                         dists[b], w_att, w_emb)
        assert jnp.allclose(out[b], ref, atol=1e-4, rtol=1e-3), \
            f"mismatch vs reference for graph {b}"

    # single-graph wrapper agrees with the batched path
    out0 = graph_attention_forward(src_feats[0], src_idx[0], dst_feats[0],
                                   dst_idx[0], dists[0], w_att, w_emb)
    out0 = jax.block_until_ready(out0)
    assert jnp.allclose(out0, out[0], atol=1e-5, rtol=1e-5)

    print("KERNEL_OK")
</pallas_src>

<mosaic_0001>
module attributes {stable_mosaic.version = 11 : i64} {
  func.func @_graph_attention_kernel(%arg0: i32, %arg1: memref<1x40x48xf32, #tpu.memory_space<vmem>>, %arg2: memref<1x64x8xf32, #tpu.memory_space<vmem>>, %arg3: memref<1x64x1xi32, #tpu.memory_space<vmem>>, %arg4: memref<1x64x1xi32, #tpu.memory_space<vmem>>, %arg5: memref<1x1x64xi32, #tpu.memory_space<vmem>>, %arg6: memref<48x128xf32, #tpu.memory_space<vmem>>, %arg7: memref<8x128xf32, #tpu.memory_space<vmem>>, %arg8: memref<1x16x128xf32, #tpu.memory_space<vmem>>) attributes {dimension_semantics = [#tpu.dimension_semantics<parallel>], iteration_bounds = array<i64: 2>, scalar_prefetch = 0 : i64, scratch_operands = 0 : i64, tpu.core_type = #tpu.core_type<tc>, window_params = [{transform_indices = @transform_0, window_bounds = array<i64: 1, 40, 48>}, {transform_indices = @transform_1, window_bounds = array<i64: 1, 64, 8>}, {transform_indices = @transform_2, window_bounds = array<i64: 1, 64, 1>}, {transform_indices = @transform_3, window_bounds = array<i64: 1, 64, 1>}, {transform_indices = @transform_4, window_bounds = array<i64: 1, 1, 64>}, {pipeline_mode = #tpu.pipeline_mode<synchronous>, transform_indices = @transform_5, window_bounds = array<i64: 48, 128>}, {pipeline_mode = #tpu.pipeline_mode<synchronous>, transform_indices = @transform_6, window_bounds = array<i64: 8, 128>}, {transform_indices = @transform_7, window_bounds = array<i64: 1, 16, 128>}]} {
    %c0 = arith.constant 0 : index
    %c0_0 = arith.constant 0 : index
    %c0_1 = arith.constant 0 : index
    %0 = vector.load %arg3[%c0, %c0_0, %c0_1] : memref<1x64x1xi32, #tpu.memory_space<vmem>>, vector<1x64x1xi32>
    %1 = vector.shape_cast %0 : vector<1x64x1xi32> to vector<64x1xi32>
    %c0_2 = arith.constant 0 : index
    %c0_3 = arith.constant 0 : index
    %c0_4 = arith.constant 0 : index
    %2 = vector.load %arg4[%c0_2, %c0_3, %c0_4] : memref<1x64x1xi32, #tpu.memory_space<vmem>>, vector<1x64x1xi32>
    %3 = vector.shape_cast %2 : vector<1x64x1xi32> to vector<64x1xi32>
    %c0_5 = arith.constant 0 : index
    %c0_6 = arith.constant 0 : index
    %c0_7 = arith.constant 0 : index
    %4 = vector.load %arg5[%c0_5, %c0_6, %c0_7] : memref<1x1x64xi32, #tpu.memory_space<vmem>>, vector<1x1x64xi32>
    %5 = vector.shape_cast %4 : vector<1x1x64xi32> to vector<1x64xi32>
    %c0_8 = arith.constant 0 : index
    %c0_9 = arith.constant 0 : index
    %c0_10 = arith.constant 0 : index
    %6 = vector.load %arg1[%c0_8, %c0_9, %c0_10] : memref<1x40x48xf32, #tpu.memory_space<vmem>>, vector<1x40x48xf32>
    %7 = vector.shape_cast %6 : vector<1x40x48xf32> to vector<40x48xf32>
    %c0_11 = arith.constant 0 : index
    %c0_12 = arith.constant 0 : index
    %8 = vector.load %arg6[%c0_11, %c0_12] : memref<48x128xf32, #tpu.memory_space<vmem>>, vector<48x128xf32>
    %cst = arith.constant dense<0.000000e+00> : vector<40x128xf32>
    %9 = tpu.matmul %7, %8, %cst {dimension_numbers = #tpu.dot_dimension_numbers<[1], [0], [0], [1], [0, 0, 1, 1], [], []>} : vector<40x48xf32>, vector<48x128xf32>, vector<40x128xf32> -> vector<40x128xf32>
    %10 = tpu.iota {dimensions = array<i32: 1>} : vector<64x40xi32>
    %11 = vector.broadcast %1 : vector<64x1xi32> to vector<64x40xi32>
    %12 = arith.cmpi eq, %10, %11 : vector<64x40xi32>
    %c24_i32 = arith.constant 24 : i32
    %13 = vector.broadcast %c24_i32 : i32 to vector<64x1xi32>
    %14 = arith.addi %3, %13 : vector<64x1xi32>
    %15 = vector.broadcast %14 : vector<64x1xi32> to vector<64x40xi32>
    %16 = arith.cmpi eq, %10, %15 : vector<64x40xi32>
    %17 = arith.ori %12, %16 : vector<64x40xi1>
    %18 = arith.extui %17 : vector<64x40xi1> to vector<64x40xi32>
    %19 = arith.sitofp %18 : vector<64x40xi32> to vector<64x40xf32>
    %20 = tpu.iota {dimensions = array<i32: 1>} : vector<64x16xi32>
    %21 = vector.broadcast %3 : vector<64x1xi32> to vector<64x16xi32>
    %22 = arith.cmpi eq, %20, %21 : vector<64x16xi32>
    %cst_13 = arith.constant dense<0.000000e+00> : vector<64x128xf32>
    %23 = tpu.matmul %19, %9, %cst_13 {dimension_numbers = #tpu.dot_dimension_numbers<[1], [0], [0], [1], [0, 0, 1, 1], [], []>} : vector<64x40xf32>, vector<40x128xf32>, vector<64x128xf32> -> vector<64x128xf32>
    %c0_14 = arith.constant 0 : index
    %c0_15 = arith.constant 0 : index
    %c0_16 = arith.constant 0 : index
    %24 = vector.load %arg2[%c0_14, %c0_15, %c0_16] : memref<1x64x8xf32, #tpu.memory_space<vmem>>, vector<1x64x8xf32>
    %25 = vector.shape_cast %24 : vector<1x64x8xf32> to vector<64x8xf32>
    %c0_17 = arith.constant 0 : index
    %c0_18 = arith.constant 0 : index
    %26 = vector.load %arg7[%c0_17, %c0_18] : memref<8x128xf32, #tpu.memory_space<vmem>>, vector<8x128xf32>
    %cst_19 = arith.constant dense<0.000000e+00> : vector<64x128xf32>
    %27 = tpu.matmul %25, %26, %cst_19 {dimension_numbers = #tpu.dot_dimension_numbers<[1], [0], [0], [1], [0, 0, 1, 1], [], []>} : vector<64x8xf32>, vector<8x128xf32>, vector<64x128xf32> -> vector<64x128xf32>
    %28 = arith.addf %23, %27 : vector<64x128xf32>
    %29 = vector.extract_strided_slice %28 {offsets = [0, 32], sizes = [64, 1], strides = [1, 1]} : vector<64x128xf32> to vector<64x1xf32>
    %cst_20 = arith.constant 0.000000e+00 : f32
    %30 = vector.broadcast %cst_20 : f32 to vector<64x1xf32>
    %31 = arith.cmpf oge, %29, %30 : vector<64x1xf32>
    %cst_21 = arith.constant 2.000000e-01 : f32
    %32 = vector.broadcast %cst_21 : f32 to vector<64x1xf32>
    %33 = arith.mulf %32, %29 : vector<64x1xf32>
    %34 = arith.select %31, %29, %33 : vector<64x1xi1>, vector<64x1xf32>
    %cst_22 = arith.constant -1.000000e+30 : f32
    %35 = vector.shape_cast %34 : vector<64x1xf32> to vector<64x1xf32>
    %36 = vector.broadcast %35 : vector<64x1xf32> to vector<64x16xf32>
    %37 = vector.broadcast %cst_22 : f32 to vector<64x16xf32>
    %38 = arith.select %22, %36, %37 : vector<64x16xi1>, vector<64x16xf32>
    %cst_23 = arith.constant dense<0xFF800000> : vector<16xf32>
    %39 = vector.multi_reduction <maximumf>, %38, %cst_23 [0] : vector<64x16xf32> to vector<16xf32>
    %40 = vector.shape_cast %39 : vector<16xf32> to vector<1x16xf32>
    %cst_24 = arith.constant -1.000000e+30 : f32
    %41 = vector.shape_cast %40 : vector<1x16xf32> to vector<1x16xf32>
    %42 = vector.broadcast %41 : vector<1x16xf32> to vector<64x16xf32>
    %43 = vector.broadcast %cst_24 : f32 to vector<64x16xf32>
    %44 = arith.select %22, %42, %43 : vector<64x16xi1>, vector<64x16xf32>
    %cst_25 = arith.constant dense<0xFF800000> : vector<64xf32>
    %45 = vector.multi_reduction <maximumf>, %44, %cst_25 [1] : vector<64x16xf32> to vector<64xf32>
    %46 = vector.shape_cast %45 : vector<64xf32> to vector<64x1xf32>
    %47 = arith.subf %34, %46 : vector<64x1xf32>
    %48 = math.exp %47 : vector<64x1xf32>
    %49 = tpu.iota {dimensions = array<i32: 1>} : vector<64x128xi32>
    %c32_i32 = arith.constant 32 : i32
    %50 = vector.broadcast %c32_i32 : i32 to vector<64x128xi32>
    %51 = arith.cmpi eq, %49, %50 : vector<64x128xi32>
    %cst_26 = arith.constant 1.000000e+00 : f32
    %52 = vector.broadcast %cst_26 : f32 to vector<64x128xf32>
    %53 = arith.select %51, %52, %28 : vector<64x128xi1>, vector<64x128xf32>
    %54 = vector.broadcast %48 : vector<64x1xf32> to vector<64x128xf32>
    %55 = arith.mulf %54, %53 : vector<64x128xf32>
    %56 = tpu.iota {dimensions = array<i32: 0>} : vector<16x64xi32>
    %57 = vector.broadcast %5 : vector<1x64xi32> to vector<16x64xi32>
    %58 = arith.cmpi eq, %56, %57 : vector<16x64xi32>
    %59 = arith.extui %58 : vector<16x64xi1> to vector<16x64xi32>
    %60 = arith.sitofp %59 : vector<16x64xi32> to vector<16x64xf32>
    %cst_27 = arith.constant dense<0.000000e+00> : vector<16x128xf32>
    %61 = tpu.matmul %60, %55, %cst_27 {dimension_numbers = #tpu.dot_dimension_numbers<[1], [0], [0], [1], [0, 0, 1, 1], [], []>} : vector<16x64xf32>, vector<64x128xf32>, vector<16x128xf32> -> vector<16x128xf32>
    %62 = vector.extract_strided_slice %61 {offsets = [0, 32], sizes = [16, 1], strides = [1, 1]} : vector<16x128xf32> to vector<16x1xf32>
    %cst_28 = arith.constant 0.000000e+00 : f32
    %63 = vector.broadcast %cst_28 : f32 to vector<16x1xf32>
    %64 = arith.cmpf ogt, %62, %63 : vector<16x1xf32>
    %cst_29 = arith.constant 1.000000e+00 : f32
    %65 = vector.broadcast %cst_29 : f32 to vector<16x1xf32>
    %66 = arith.select %64, %62, %65 : vector<16x1xi1>, vector<16x1xf32>
    %67 = vector.broadcast %66 : vector<16x1xf32> to vector<16x128xf32>
    %68 = arith.divf %61, %67 : vector<16x128xf32>
    %cst_30 = arith.constant 0.000000e+00 : f32
    %69 = vector.broadcast %cst_30 : f32 to vector<16x128xf32>
    %70 = arith.maximumf %68, %69 : vector<16x128xf32>
    %c0_31 = arith.constant 0 : index
    %c0_32 = arith.constant 0 : index
    %c0_33 = arith.constant 0 : index
    %71 = vector.load %arg8[%c0_31, %c0_32, %c0_33] : memref<1x16x128xf32, #tpu.memory_space<vmem>>, vector<1x16x128xf32>
    %72 = vector.shape_cast %71 : vector<1x16x128xf32> to vector<16x128xf32>
    %73 = vector.shape_cast %70 : vector<16x128xf32> to vector<1x16x128xf32>
    tpu.vector_store %arg8[%c0_31, %c0_32, %c0_33], %73 {strides = array<i32>} : memref<1x16x128xf32, #tpu.memory_space<vmem>>, vector<1x16x128xf32>,
    return
  }
  func.func @transform_0(%arg0: i32) -> (i32, i32, i32) {
    %c0_i32 = arith.constant 0 : i32
    %c0_i32_0 = arith.constant 0 : i32
    %c0_i32_1 = arith.constant 0 : i32
    return %arg0, %c0_i32, %c0_i32_0 : i32, i32, i32
  }
  func.func @transform_1(%arg0: i32) -> (i32, i32, i32) {
    %c0_i32 = arith.constant 0 : i32
    %c0_i32_0 = arith.constant 0 : i32
    %c0_i32_1 = arith.constant 0 : i32
    return %arg0, %c0_i32, %c0_i32_0 : i32, i32, i32
  }
  func.func @transform_2(%arg0: i32) -> (i32, i32, i32) {
    %c0_i32 = arith.constant 0 : i32
    %c0_i32_0 = arith.constant 0 : i32
    %c0_i32_1 = arith.constant 0 : i32
    return %arg0, %c0_i32, %c0_i32_0 : i32, i32, i32
  }
  func.func @transform_3(%arg0: i32) -> (i32, i32, i32) {
    %c0_i32 = arith.constant 0 : i32
    %c0_i32_0 = arith.constant 0 : i32
    %c0_i32_1 = arith.constant 0 : i32
    return %arg0, %c0_i32, %c0_i32_0 : i32, i32, i32
  }
  func.func @transform_4(%arg0: i32) -> (i32, i32, i32) {
    %c0_i32 = arith.constant 0 : i32
    %c0_i32_0 = arith.constant 0 : i32
    %c0_i32_1 = arith.constant 0 : i32
    return %arg0, %c0_i32, %c0_i32_0 : i32, i32, i32
  }
  func.func @transform_5(%arg0: i32) -> (i32, i32) {
    %c0_i32 = arith.constant 0 : i32
    %c0_i32_0 = arith.constant 0 : i32
    %c0_i32_1 = arith.constant 0 : i32
    return %c0_i32, %c0_i32_0 : i32, i32
  }
  func.func @transform_6(%arg0: i32) -> (i32, i32) {
    %c0_i32 = arith.constant 0 : i32
    %c0_i32_0 = arith.constant 0 : i32
    %c0_i32_1 = arith.constant 0 : i32
    return %c0_i32, %c0_i32_0 : i32, i32
  }
  func.func @transform_7(%arg0: i32) -> (i32, i32, i32) {
    %c0_i32 = arith.constant 0 : i32
    %c0_i32_0 = arith.constant 0 : i32
    %c0_i32_1 = arith.constant 0 : i32
    return %arg0, %c0_i32, %c0_i32_0 : i32, i32, i32
  }
}

</mosaic_0001>

<llo_original>
// kernel: tpu_custom_call.1
$region0: #{tpu_custom_call.1}
  #allocation0 [shape = 'u32[]', space=smem, size = 0x4, offset = 0x4, fixed_abs, tag = 'smem constant byte address 0x4 - core index']
  #allocation1 [shape = 'u32[72,128]{1,0:T(1,128)}', space=vmem, size = 0x9000, scoped, tag = 'internal scratch']
  %s0 = inlined_call_operand.vmem [shape: f32[2,40,48], index: 0, kind: input, shape index: {}]
  %s1 = inlined_call_operand.vmem [shape: f32[2,64,8], index: 1, kind: input, shape index: {}]
  %s2 = inlined_call_operand.vmem [shape: s32[2,64,1], index: 2, kind: input, shape index: {}]
  %s3 = inlined_call_operand.vmem [shape: s32[2,64,1], index: 3, kind: input, shape index: {}]
  %s4 = inlined_call_operand.vmem [shape: s32[2,1,64], index: 4, kind: input, shape index: {}]
  %s5 = inlined_call_operand.vmem [shape: f32[48,128], index: 5, kind: input, shape index: {}]
  %s6 = inlined_call_operand.vmem [shape: f32[8,128], index: 6, kind: input, shape index: {}]
  %s7 = inlined_call_operand.hbm [shape: f32[2,16,128], index: 7, kind: output, shape index: {}]
  %s8 = sld [smem:[#allocation0]]
  $region61: #{tpu_custom_call.1} parent=0
    _
  %s10 = ssub.s32 1, %s8
  %s11 = scalar_select 0, %s10, %s8
  $region1: #{tpu_custom_call.1} parent=0
    #allocation2 [shape = 'u8[16384]{0}', space=vmem, size = 0x4000, scoped, tag = 'output window, operand 0']
    #allocation3 [shape = 's32[2]{0}', space=sflag, size = 0x8, scoped, tag = 'scoped memory for tpu_custom_call.1']
    %12 = vsyncpa [#allocation3], 0
    %s13 = scalar_lea.sflag [#allocation3], 1
    %14 = vsyncpa %s13, 0
    loop: start=0, step=1, limit=4
    $region2: #{tpu_custom_call.1} parent=1 // loop_pre_header
      _
    $region3: #{tpu_custom_call.1} parent=1 // loop_header
      %s16 = sphi 0, %s20
      %p17 = scmp.ge.s32.totalorder %s16, 4
      %s26 = sphi 0, %s28
      %s29 = sphi 0, %s26
      %s30 = sphi 0, %s29
      %s46 = sphi 0, %s30
      %s52 = sphi 0, %s54
      %s55 = sphi 0, %s52
      %s56 = sphi 0, %s55
      %s72 = sphi 0, %s56
      %s78 = sphi 0, %s80
      %s81 = sphi 0, %s78
      %s82 = sphi 0, %s81
      %s98 = sphi 0, %s82
      %s104 = sphi 0, %s106
      %s107 = sphi 0, %s104
      %s108 = sphi 0, %s107
      %s124 = sphi 0, %s108
      %s130 = sphi 0, %s132
      %s133 = sphi 0, %s130
      %s134 = sphi 0, %s133
      %s150 = sphi 0, %s134
      %s154 = sphi 0, %s154
      %s156 = sphi 0, %s154
      %s157 = sphi 0, %s156
      %s171 = sphi 0, %s157
      %s175 = sphi 0, %s175
      %s177 = sphi 0, %s175
      %s178 = sphi 0, %s177
      %s192 = sphi 0, %s178
      %s198 = sphi 0, %s200
      %s201 = sphi 0, %s198
      %s202 = sphi 0, %s201
      %s218 = sphi 0, %s202
    $region4: #{tpu_custom_call.1} parent=1 // loop_header_branch
      %19 = sbr.rel (%p17) target = $region8
    $region5: #{tpu_custom_call.1} parent=1 // loop_body
      %s21 = ssub.s32 %s16, 1
      %s22 = ssub.s32 %s16, 2
      %s23 = sadd.s32 %s16, 1
      %s24 = ssub.s32 %s16, %s23
      %p25 = scmp.eq.s32.totalorder %s24, 0
      %s27 = sadd.s32 %s26, 1
      %s28 = scalar_select %p25, %s26, %s27
      %p31 = pneg %p25
      %p32 = scmp.eq.s32.totalorder %s16, 1
      %p33 = por %p31, %p32
      %p34 = scmp.ne.s32.totalorder %s26, %s29
      %p35 = scmp.eq.s32.totalorder %s16, 0
      %p36 = por %p34, %p35
      %p37 = scmp.ne.s32.totalorder %s26, %s29
      %p38 = scmp.eq.s32.totalorder %s21, 1
      %p39 = por %p37, %p38
      %p40 = scmp.ne.s32.totalorder %s29, %s30
      %p41 = scmp.eq.s32.totalorder %s21, 0
      %p42 = por %p40, %p41
      %p43 = scmp.ne.s32.totalorder %s29, %s30
      %p44 = scmp.eq.s32.totalorder %s22, 1
      %p45 = por %p43, %p44
      %p47 = scmp.ne.s32.totalorder %s30, %s46
      %p48 = scmp.eq.s32.totalorder %s22, 0
      %p49 = por %p47, %p48
      %s50 = ssub.s32 %s16, %s23
      %p51 = scmp.eq.s32.totalorder %s50, 0
      %s53 = sadd.s32 %s52, 1
      %s54 = scalar_select %p51, %s52, %s53
      %p57 = pneg %p51
      %p58 = scmp.eq.s32.totalorder %s16, 1
      %p59 = por %p57, %p58
      %p60 = scmp.ne.s32.totalorder %s52, %s55
      %p61 = scmp.eq.s32.totalorder %s16, 0
      %p62 = por %p60, %p61
      %p63 = scmp.ne.s32.totalorder %s52, %s55
      %p64 = scmp.eq.s32.totalorder %s21, 1
      %p65 = por %p63, %p64
      %p66 = scmp.ne.s32.totalorder %s55, %s56
      %p67 = scmp.eq.s32.totalorder %s21, 0
      %p68 = por %p66, %p67
      %p69 = scmp.ne.s32.totalorder %s55, %s56
      %p70 = scmp.eq.s32.totalorder %s22, 1
      %p71 = por %p69, %p70
      %p73 = scmp.ne.s32.totalorder %s56, %s72
      %p74 = scmp.eq.s32.totalorder %s22, 0
      %p75 = por %p73, %p74
      %s76 = ssub.s32 %s16, %s23
      %p77 = scmp.eq.s32.totalorder %s76, 0
      %s79 = sadd.s32 %s78, 1
      %s80 = scalar_select %p77, %s78, %s79
      %p83 = pneg %p77
      %p84 = scmp.eq.s32.totalorder %s16, 1
      %p85 = por %p83, %p84
      %p86 = scmp.ne.s32.totalorder %s78, %s81
      %p87 = scmp.eq.s32.totalorder %s16, 0
      %p88 = por %p86, %p87
      %p89 = scmp.ne.s32.totalorder %s78, %s81
      %p90 = scmp.eq.s32.totalorder %s21, 1
      %p91 = por %p89, %p90
      %p92 = scmp.ne.s32.totalorder %s81, %s82
      %p93 = scmp.eq.s32.totalorder %s21, 0
      %p94 = por %p92, %p93
      %p95 = scmp.ne.s32.totalorder %s81, %s82
      %p96 = scmp.eq.s32.totalorder %s22, 1
      %p97 = por %p95, %p96
      %p99 = scmp.ne.s32.totalorder %s82, %s98
      %p100 = scmp.eq.s32.totalorder %s22, 0
      %p101 = por %p99, %p100
      %s102 = ssub.s32 %s16, %s23
      %p103 = scmp.eq.s32.totalorder %s102, 0
      %s105 = sadd.s32 %s104, 1
      %s106 = scalar_select %p103, %s104, %s105
      %p109 = pneg %p103
      %p110 = scmp.eq.s32.totalorder %s16, 1
      %p111 = por %p109, %p110
      %p112 = scmp.ne.s32.totalorder %s104, %s107
      %p113 = scmp.eq.s32.totalorder %s16, 0
      %p114 = por %p112, %p113
      %p115 = scmp.ne.s32.totalorder %s104, %s107
      %p116 = scmp.eq.s32.totalorder %s21, 1
      %p117 = por %p115, %p116
      %p118 = scmp.ne.s32.totalorder %s107, %s108
      %p119 = scmp.eq.s32.totalorder %s21, 0
      %p120 = por %p118, %p119
      %p121 = scmp.ne.s32.totalorder %s107, %s108
      %p122 = scmp.eq.s32.totalorder %s22, 1
      %p123 = por %p121, %p122
      %p125 = scmp.ne.s32.totalorder %s108, %s124
      %p126 = scmp.eq.s32.totalorder %s22, 0
      %p127 = por %p125, %p126
      %s128 = ssub.s32 %s16, %s23
      %p129 = scmp.eq.s32.totalorder %s128, 0
      %s131 = sadd.s32 %s130, 1
      %s132 = scalar_select %p129, %s130, %s131
      %p135 = pneg %p129
      %p136 = scmp.eq.s32.totalorder %s16, 1
      %p137 = por %p135, %p136
      %p138 = scmp.ne.s32.totalorder %s130, %s133
      %p139 = scmp.eq.s32.totalorder %s16, 0
      %p140 = por %p138, %p139
      %p141 = scmp.ne.s32.totalorder %s130, %s133
      %p142 = scmp.eq.s32.totalorder %s21, 1
      %p143 = por %p141, %p142
      %p144 = scmp.ne.s32.totalorder %s133, %s134
      %p145 = scmp.eq.s32.totalorder %s21, 0
      %p146 = por %p144, %p145
      %p147 = scmp.ne.s32.totalorder %s133, %s134
      %p148 = scmp.eq.s32.totalorder %s22, 1
      %p149 = por %p147, %p148
      %p151 = scmp.ne.s32.totalorder %s134, %s150
      %p152 = scmp.eq.s32.totalorder %s22, 0
      %p153 = por %p151, %p152
      %s155 = sadd.s32 %s154, 1
      %p158 = scmp.eq.s32.totalorder %s16, 1
      %p159 = scmp.ne.s32.totalorder %s154, %s156
      %p160 = scmp.eq.s32.totalorder %s16, 0
      %p161 = por %p159, %p160
      %p162 = scmp.ne.s32.totalorder %s154, %s156
      %p163 = scmp.eq.s32.totalorder %s21, 1
      %p164 = por %p162, %p163
      %p165 = scmp.ne.s32.totalorder %s156, %s157
      %p166 = scmp.eq.s32.totalorder %s21, 0
      %p167 = por %p165, %p166
      %p168 = scmp.ne.s32.totalorder %s156, %s157
      %p169 = scmp.eq.s32.totalorder %s22, 1
      %p170 = por %p168, %p169
      %p172 = scmp.ne.s32.totalorder %s157, %s171
      %p173 = scmp.eq.s32.totalorder %s22, 0
      %p174 = por %p172, %p173
      %s176 = sadd.s32 %s175, 1
      %p179 = scmp.eq.s32.totalorder %s16, 1
      %p180 = scmp.ne.s32.totalorder %s175, %s177
      %p181 = scmp.eq.s32.totalorder %s16, 0
      %p182 = por %p180, %p181
      %p183 = scmp.ne.s32.totalorder %s175, %s177
      %p184 = scmp.eq.s32.totalorder %s21, 1
      %p185 = por %p183, %p184
      %p186 = scmp.ne.s32.totalorder %s177, %s178
      %p187 = scmp.eq.s32.totalorder %s21, 0
      %p188 = por %p186, %p187
      %p189 = scmp.ne.s32.totalorder %s177, %s178
      %p190 = scmp.eq.s32.totalorder %s22, 1
      %p191 = por %p189, %p190
      %p193 = scmp.ne.s32.totalorder %s178, %s192
      %p194 = scmp.eq.s32.totalorder %s22, 0
      %p195 = por %p193, %p194
      %s196 = ssub.s32 %s16, %s23
      %p197 = scmp.eq.s32.totalorder %s196, 0
      %s199 = sadd.s32 %s198, 1
      %s200 = scalar_select %p197, %s198, %s199
      %p203 = pneg %p197
      %p204 = scmp.eq.s32.totalorder %s16, 1
      %p205 = por %p203, %p204
      %p206 = scmp.ne.s32.totalorder %s198, %s201
      %p207 = scmp.eq.s32.totalorder %s16, 0
      %p208 = por %p206, %p207
      %p209 = scmp.ne.s32.totalorder %s198, %s201
      %p210 = scmp.eq.s32.totalorder %s21, 1
      %p211 = por %p209, %p210
      %p212 = scmp.ne.s32.totalorder %s201, %s202
      %p213 = scmp.eq.s32.totalorder %s21, 0
      %p214 = por %p212, %p213
      %p215 = scmp.ne.s32.totalorder %s201, %s202
      %p216 = scmp.eq.s32.totalorder %s22, 1
      %p217 = por %p215, %p216
      %p219 = scmp.ne.s32.totalorder %s202, %s218
      %p220 = scmp.eq.s32.totalorder %s22, 0
      %p221 = por %p219, %p220
      %p222 = scmp.le.s32.totalorder 1, %s16
      %p223 = scmp.lt.s32.totalorder %s16, 3
      %p224 = pnand %p222, %p223
      %p225 = pneg %p224
      // Predicated region
      $region9: #{tpu_custom_call.1} parent=5 // pred_check
        _
      $region10: #{tpu_custom_call.1} parent=5 // pred_check_branch
        %227 = sbr.rel (%p224) target = $region12
      $region11: #{tpu_custom_call.1} parent=5 // pred_region
        %s228 = ssub.s32 %s16, 1
        // Predicated region
        $region13: #{tpu_custom_call.1} parent=11 // pred_check
          %p229 = pneg %p167
        $region14: #{tpu_custom_call.1} parent=11 // pred_check_branch
          %231 = sbr.rel (%p229) target = $region16
        $region15: #{tpu_custom_call.1} parent=11 // pred_region
          _
        $region16: #{tpu_custom_call.1} parent=11 // pred_fallthru
          _
        // Predicated region
        $region17: #{tpu_custom_call.1} parent=11 // pred_check
          %p232 = pneg %p188
        $region18: #{tpu_custom_call.1} parent=11 // pred_check_branch
          %234 = sbr.rel (%p232) target = $region20
        $region19: #{tpu_custom_call.1} parent=11 // pred_region
          _
        $region20: #{tpu_custom_call.1} parent=11 // pred_fallthru
          _
      $region12: #{tpu_custom_call.1} parent=5 // pred_fallthru
        _
      %p235 = scmp.lt.s32.totalorder %s16, 2
      // Predicated region
      $region21: #{tpu_custom_call.1} parent=5 // pred_check
        %p236 = pneg %p235
      $region22: #{tpu_custom_call.1} parent=5 // pred_check_branch
        %238 = sbr.rel (%p236) target = $region24
      $region23: #{tpu_custom_call.1} parent=5 // pred_region
        // Predicated region
        $region25: #{tpu_custom_call.1} parent=23 // pred_check
          %p239 = pneg %p36
        $region26: #{tpu_custom_call.1} parent=23 // pred_check_branch
          %241 = sbr.rel (%p239) target = $region28
        $region27: #{tpu_custom_call.1} parent=23 // pred_region
          %p242 = scmp.lt.s32.totalorder %s16, 1
          %s243 = scalar_select %p242, %s16, 1
          %s244 = smul.addr %s243, 5
          %s245 = smul.addr %s244, 8
          %s246 = scalar_lea.vmem %s0, %s245
        $region28: #{tpu_custom_call.1} parent=23 // pred_fallthru
          _
        // Predicated region
        $region29: #{tpu_custom_call.1} parent=23 // pred_check
          %p247 = pneg %p62
        $region30: #{tpu_custom_call.1} parent=23 // pred_check_branch
          %249 = sbr.rel (%p247) target = $region32
        $region31: #{tpu_custom_call.1} parent=23 // pred_region
          %p250 = scmp.lt.s32.totalorder %s16, 1
          %s251 = scalar_select %p250, %s16, 1
          %s252 = smul.addr %s251, 8
          %s253 = smul.addr %s252, 8
          %s254 = scalar_lea.vmem %s1, %s253
        $region32: #{tpu_custom_call.1} parent=23 // pred_fallthru
          _
        // Predicated region
        $region33: #{tpu_custom_call.1} parent=23 // pred_check
          %p255 = pneg %p88
        $region34: #{tpu_custom_call.1} parent=23 // pred_check_branch
          %257 = sbr.rel (%p255) target = $region36
        $region35: #{tpu_custom_call.1} parent=23 // pred_region
          %p258 = scmp.lt.s32.totalorder %s16, 1
          %s259 = scalar_select %p258, %s16, 1
          %s260 = smul.addr %s259, 8
          %s261 = smul.addr %s260, 8
          %s262 = scalar_lea.vmem %s2, %s261
        $region36: #{tpu_custom_call.1} parent=23 // pred_fallthru
          _
        // Predicated region
        $region37: #{tpu_custom_call.1} parent=23 // pred_check
          %p263 = pneg %p114
        $region38: #{tpu_custom_call.1} parent=23 // pred_check_branch
          %265 = sbr.rel (%p263) target = $region40
        $region39: #{tpu_custom_call.1} parent=23 // pred_region
          %p266 = scmp.lt.s32.totalorder %s16, 1
          %s267 = scalar_select %p266, %s16, 1
          %s268 = smul.addr %s267, 8
          %s269 = smul.addr %s268, 8
          %s270 = scalar_lea.vmem %s3, %s269
        $region40: #{tpu_custom_call.1} parent=23 // pred_fallthru
          _
        // Predicated region
        $region41: #{tpu_custom_call.1} parent=23 // pred_check
          %p271 = pneg %p140
        $region42: #{tpu_custom_call.1} parent=23 // pred_check_branch
          %273 = sbr.rel (%p271) target = $region44
        $region43: #{tpu_custom_call.1} parent=23 // pred_region
          %p274 = scmp.lt.s32.totalorder %s16, 1
          %s275 = scalar_select %p274, %s16, 1
          %s276 = scalar_lea.vmem %s4, %s275
        $region44: #{tpu_custom_call.1} parent=23 // pred_fallthru
          _
      $region24: #{tpu_custom_call.1} parent=5 // pred_fallthru
        _
      %p277 = scmp.le.s32.totalorder 1, %s16
      %p278 = scmp.lt.s32.totalorder %s16, 3
      %p279 = pnand %p277, %p278
      %p280 = pneg %p279
      // Predicated region
      $region45: #{tpu_custom_call.1} parent=5 // pred_check
        _
      $region46: #{tpu_custom_call.1} parent=5 // pred_check_branch
        %282 = sbr.rel (%p279) target = $region48
      $region47: #{tpu_custom_call.1} parent=5 // pred_region
        %s283 = ssub.s32 %s16, 1
        %p284 = scmp.lt.s32.totalorder %s21, 1
        %s285 = scalar_select %p284, %s21, 1
        %s286 = smul.addr %s285, 5
        %s287 = smul.addr %s286, 8
        %s288 = scalar_lea.vmem %s0, %s287
        %p289 = pneg %p42
        %p290 = pneg %p39
        %p291 = scmp.lt.s32.totalorder %s21, 1
        %s292 = scalar_select %p291, %s21, 1
        %s293 = smul.addr %s292, 8
        %s294 = smul.addr %s293, 8
        %s295 = scalar_lea.vmem %s1, %s294
        %p296 = pneg %p68
        %p297 = pneg %p65
        %p298 = scmp.lt.s32.totalorder %s21, 1
        %s299 = scalar_select %p298, %s21, 1
        %s300 = smul.addr %s299, 8
        %s301 = smul.addr %s300, 8
        %s302 = scalar_lea.vmem %s2, %s301
        %p303 = pneg %p94
        %p304 = pneg %p91
        %p305 = scmp.lt.s32.totalorder %s21, 1
        %s306 = scalar_select %p305, %s21, 1
        %s307 = smul.addr %s306, 8
        %s308 = smul.addr %s307, 8
        %s309 = scalar_lea.vmem %s3, %s308
        %p310 = pneg %p120
        %p311 = pneg %p117
        %p312 = scmp.lt.s32.totalorder %s21, 1
        %s313 = scalar_select %p312, %s21, 1
        %s314 = scalar_lea.vmem %s4, %s313
        %p315 = pneg %p146
        %p316 = pneg %p143
        %p317 = pneg %p167
        %p318 = pneg %p164
        %p319 = pneg %p188
        %p320 = pneg %p185
        %p321 = pneg %p214
        %p322 = pneg %p211
        %s323 = sand.u32 %s201, 1
        %s324 = scalar_lea.sflag [#allocation3], %s323
        %s325 = sand.u32 %s201, 1
        %s326 = smul.addr %s325, 16
        %s327 = scalar_lea.vmem [#allocation2], %s326
        %p328 = scmp.lt.s32.totalorder %s21, 1
        %s329 = scalar_select %p328, %s21, 1
        %s330 = smul.addr %s329, 5
        %s331 = smul.addr %s330, 8
        %s332 = scalar_lea.vmem %s0, %s331
        %p333 = scmp.lt.s32.totalorder %s21, 1
        %s334 = scalar_select %p333, %s21, 1
        %s335 = smul.addr %s334, 8
        %s336 = smul.addr %s335, 8
        %s337 = scalar_lea.vmem %s1, %s336
        %p338 = scmp.lt.s32.totalorder %s21, 1
        %s339 = scalar_select %p338, %s21, 1
        %s340 = smul.addr %s339, 8
        %s341 = smul.addr %s340, 8
        %s342 = scalar_lea.vmem %s2, %s341
        %p343 = scmp.lt.s32.totalorder %s21, 1
        %s344 = scalar_select %p343, %s21, 1
        %s345 = smul.addr %s344, 8
        %s346 = smul.addr %s345, 8
        %s347 = scalar_lea.vmem %s3, %s346
        %p348 = scmp.lt.s32.totalorder %s21, 1
        %s349 = scalar_select %p348, %s21, 1
        %s350 = scalar_lea.vmem %s4, %s349
        %v351 = vld [vmem:[%s342] sm:$0xff]
        %v352 = vld [vmem:[%s342 + $0x8] sm:$0xff]
        %v353 = vld [vmem:[%s342 + $0x10] sm:$0xff]
        %v354 = vld [vmem:[%s342 + $0x18] sm:$0xff]
        %v355 = vld [vmem:[%s342 + $0x20] sm:$0xff]
        %v356 = vld [vmem:[%s342 + $0x28] sm:$0xff]
        %v357 = vld [vmem:[%s342 + $0x30] sm:$0xff]
        %v358 = vld [vmem:[%s342 + $0x38] sm:$0xff]
        %v359 = vld [vmem:[%s347] sm:$0xff]
        %v360 = vld [vmem:[%s347 + $0x8] sm:$0xff]
        %v361 = vld [vmem:[%s347 + $0x10] sm:$0xff]
        %v362 = vld [vmem:[%s347 + $0x18] sm:$0xff]
        %v363 = vld [vmem:[%s347 + $0x20] sm:$0xff]
        %v364 = vld [vmem:[%s347 + $0x28] sm:$0xff]
        %v365 = vld [vmem:[%s347 + $0x30] sm:$0xff]
        %v366 = vld [vmem:[%s347 + $0x38] sm:$0xff]
        %v367 = vld [vmem:[%s350] sm:$0x1]
        %v368 = vld [vmem:[%s332] sm:$0xff]
        %v369 = vld [vmem:[%s332 + $0x8] sm:$0xff]
        %v370 = vld [vmem:[%s332 + $0x10] sm:$0xff]
        %v371 = vld [vmem:[%s332 + $0x18] sm:$0xff]
        %v372 = vld [vmem:[%s332 + $0x20] sm:$0xff]
        %v373 = vld [vmem:[%s5] sm:$0xff]
        %v374 = vld [vmem:[%s5 + $0x8] sm:$0xff]
        %v375 = vld [vmem:[%s5 + $0x10] sm:$0xff]
        %v376 = vld [vmem:[%s5 + $0x18] sm:$0xff]
        %v377 = vld [vmem:[%s5 + $0x20] sm:$0xff]
        %v378 = vld [vmem:[%s5 + $0x28] sm:$0xff]
        %vm379 = vcmask 392192
        %v381 = vsel %vm379, %v368, 0
        %v384 = vsel %vm379, %v369, 0
        %v387 = vsel %vm379, %v370, 0
        %v390 = vsel %vm379, %v371, 0
        %v393 = vsel %vm379, %v372, 0
        %395 = vmatpush.msra.mxu0 0.0
        %396 = vmatpush.msra.mxu0 0.0
        %397 = vmatpush.msra.mxu0 0.0
        %398 = vmatpush.msra.mxu0 0.0
        %399 = vmatpush.msra.mxu0 0.0
        %400 = vmatpush.msra.mxu0 0.0
        %401 = vmatpush.msra.mxu0 0.0
        %402 = vmatpush.msra.mxu0 0.0
        %403 = vmatpush.msra.mxu0 0.0
        %404 = vmatpush.msra.mxu0 0.0
        %405 = vmatpush.msra.mxu0 %v378
        %406 = vmatpush.msra.mxu0 %v377
        %407 = vmatpush.msra.mxu0 %v376
        %408 = vmatpush.msra.mxu0 %v375
        %409 = vmatpush.msra.mxu0 %v374
        %410 = vmatpush.msra.mxu0 %v373
        %411 = vmatmul.f32.gmra.mxu0 %v381
        %v412 = vpop.f32.mrf.mxu0
        %v413 = vadd.f32 0.0, %v412
        %414 = vmatmul.f32.gmra.mxu0 %v384
        %v415 = vpop.f32.mrf.mxu0
        %v416 = vadd.f32 0.0, %v415
        %417 = vmatmul.f32.gmra.mxu0 %v387
        %v418 = vpop.f32.mrf.mxu0
        %v419 = vadd.f32 0.0, %v418
        %420 = vmatmul.f32.gmra.mxu0 %v390
        %v421 = vpop.f32.mrf.mxu0
        %v422 = vadd.f32 0.0, %v421
        %423 = vmatmul.f32.gmra.mxu0 %v393
        %v424 = vpop.f32.mrf.mxu0
        %v425 = vadd.f32 0.0, %v424
        %426 = vdwg.mxu0
        %v427 = vlaneseq
        %v428 = vand.u32 %v427, 127
        %429 = vset.pattern.permute.xlu0 0
        %430 = vperm.xlu0 %429, %v351
        %v431 = vpop.permute.xlu0 %430
        %432 = vset.pattern.permute.xlu0 0
        %433 = vperm.xlu0 %432, %v352
        %v434 = vpop.permute.xlu0 %433
        %435 = vset.pattern.permute.xlu0 0
        %436 = vperm.xlu0 %435, %v353
        %v437 = vpop.permute.xlu0 %436
        %438 = vset.pattern.permute.xlu0 0
        %439 = vperm.xlu0 %438, %v354
        %v440 = vpop.permute.xlu0 %439
        %441 = vset.pattern.permute.xlu0 0
        %442 = vperm.xlu0 %441, %v355
        %v443 = vpop.permute.xlu0 %442
        %444 = vset.pattern.permute.xlu0 0
        %445 = vperm.xlu0 %444, %v356
        %v446 = vpop.permute.xlu0 %445
        %447 = vset.pattern.permute.xlu0 0
        %448 = vperm.xlu0 %447, %v357
        %v449 = vpop.permute.xlu0 %448
        %450 = vset.pattern.permute.xlu0 0
        %451 = vperm.xlu0 %450, %v358
        %v452 = vpop.permute.xlu0 %451
        %vm453 = vcmp.eq.s32.totalorder %v428, %v431
        %vm454 = vcmp.eq.s32.totalorder %v428, %v434
        %vm455 = vcmp.eq.s32.totalorder %v428, %v437
        %vm456 = vcmp.eq.s32.totalorder %v428, %v440
        %vm457 = vcmp.eq.s32.totalorder %v428, %v443
        %vm458 = vcmp.eq.s32.totalorder %v428, %v446
        %vm459 = vcmp.eq.s32.totalorder %v428, %v449
        %vm460 = vcmp.eq.s32.totalorder %v428, %v452
        %v461 = vadd.s32 %v359, 24
        %v462 = vadd.s32 %v360, 24
        %v463 = vadd.s32 %v361, 24
        %v464 = vadd.s32 %v362, 24
        %v465 = vadd.s32 %v363, 24
        %v466 = vadd.s32 %v364, 24
        %v467 = vadd.s32 %v365, 24
        %v468 = vadd.s32 %v366, 24
        %469 = vset.pattern.permute.xlu0 0
        %470 = vperm.xlu0 %469, %v461
        %v471 = vpop.permute.xlu0 %470
        %472 = vset.pattern.permute.xlu0 0
        %473 = vperm.xlu0 %472, %v462
        %v474 = vpop.permute.xlu0 %473
        %475 = vset.pattern.permute.xlu0 0
        %476 = vperm.xlu0 %475, %v463
        %v477 = vpop.permute.xlu0 %476
        %478 = vset.pattern.permute.xlu0 0
        %479 = vperm.xlu0 %478, %v464
        %v480 = vpop.permute.xlu0 %479
        %481 = vset.pattern.permute.xlu0 0
        %482 = vperm.xlu0 %481, %v465
        %v483 = vpop.permute.xlu0 %482
        %484 = vset.pattern.permute.xlu0 0
        %485 = vperm.xlu0 %484, %v466
        %v486 = vpop.permute.xlu0 %485
        %487 = vset.pattern.permute.xlu0 0
        %488 = vperm.xlu0 %487, %v467
        %v489 = vpop.permute.xlu0 %488
        %490 = vset.pattern.permute.xlu0 0
        %491 = vperm.xlu0 %490, %v468
        %v492 = vpop.permute.xlu0 %491
        %vm493 = vcmp.eq.s32.totalorder %v428, %v471
        %vm494 = vcmp.eq.s32.totalorder %v428, %v474
        %vm495 = vcmp.eq.s32.totalorder %v428, %v477
        %vm496 = vcmp.eq.s32.totalorder %v428, %v480
        %vm497 = vcmp.eq.s32.totalorder %v428, %v483
        %vm498 = vcmp.eq.s32.totalorder %v428, %v486
        %vm499 = vcmp.eq.s32.totalorder %v428, %v489
        %vm500 = vcmp.eq.s32.totalorder %v428, %v492
        %vm501 = vmor %vm453, %vm493
        %vm502 = vmor %vm454, %vm494
        %vm503 = vmor %vm455, %vm495
        %vm504 = vmor %vm456, %vm496
        %vm505 = vmor %vm457, %vm497
        %vm506 = vmor %vm458, %vm498
        %vm507 = vmor %vm459, %vm499
        %vm508 = vmor %vm460, %vm500
        %v509 = vsel %vm501, 1, 0
        %v510 = vsel %vm502, 1, 0
        %v511 = vsel %vm503, 1, 0
        %v512 = vsel %vm504, 1, 0
        %v513 = vsel %vm505, 1, 0
        %v514 = vsel %vm506, 1, 0
        %v515 = vsel %vm507, 1, 0
        %v516 = vsel %vm508, 1, 0
        %v517 = vcvt.s32.f32 %v509
        %v518 = vcvt.s32.f32 %v510
        %v519 = vcvt.s32.f32 %v511
        %v520 = vcvt.s32.f32 %v512
        %v521 = vcvt.s32.f32 %v513
        %v522 = vcvt.s32.f32 %v514
        %v523 = vcvt.s32.f32 %v515
        %v524 = vcvt.s32.f32 %v516
        %525 = vset.pattern.permute.xlu0 0
        %526 = vperm.xlu0 %525, %v359
        %v527 = vpop.permute.xlu0 %526
        %528 = vset.pattern.permute.xlu0 0
        %529 = vperm.xlu0 %528, %v360
        %v530 = vpop.permute.xlu0 %529
        %531 = vset.pattern.permute.xlu0 0
        %532 = vperm.xlu0 %531, %v361
        %v533 = vpop.permute.xlu0 %532
        %534 = vset.pattern.permute.xlu0 0
        %535 = vperm.xlu0 %534, %v362
        %v536 = vpop.permute.xlu0 %535
        %537 = vset.pattern.permute.xlu0 0
        %538 = vperm.xlu0 %537, %v363
        %v539 = vpop.permute.xlu0 %538
        %540 = vset.pattern.permute.xlu0 0
        %541 = vperm.xlu0 %540, %v364
        %v542 = vpop.permute.xlu0 %541
        %543 = vset.pattern.permute.xlu0 0
        %544 = vperm.xlu0 %543, %v365
        %v545 = vpop.permute.xlu0 %544
        %546 = vset.pattern.permute.xlu0 0
        %547 = vperm.xlu0 %546, %v366
        %v548 = vpop.permute.xlu0 %547
        %vm549 = vcmp.eq.s32.totalorder %v428, %v527
        %vm550 = vcmp.eq.s32.totalorder %v428, %v530
        %vm551 = vcmp.eq.s32.totalorder %v428, %v533
        %vm552 = vcmp.eq.s32.totalorder %v428, %v536
        %vm553 = vcmp.eq.s32.totalorder %v428, %v539
        %vm554 = vcmp.eq.s32.totalorder %v428, %v542
        %vm555 = vcmp.eq.s32.totalorder %v428, %v545
        %vm556 = vcmp.eq.s32.totalorder %v428, %v548
        %v557 = vld [vmem:[%s337] sm:$0xff]
        %v558 = vld [vmem:[%s337 + $0x8] sm:$0xff]
        %v559 = vld [vmem:[%s337 + $0x10] sm:$0xff]
        %v560 = vld [vmem:[%s337 + $0x18] sm:$0xff]
        %v561 = vld [vmem:[%s337 + $0x20] sm:$0xff]
        %v562 = vld [vmem:[%s337 + $0x28] sm:$0xff]
        %v563 = vld [vmem:[%s337 + $0x30] sm:$0xff]
        %v564 = vld [vmem:[%s337 + $0x38] sm:$0xff]
        %v565 = vld [vmem:[%s6] sm:$0xff]
        %vm566 = vcmask 64512
        %v568 = vsel %vm566, %v557, 0
        %v571 = vsel %vm566, %v558, 0
        %v574 = vsel %vm566, %v559, 0
        %v577 = vsel %vm566, %v560, 0
        %v580 = vsel %vm566, %v561, 0
        %v583 = vsel %vm566, %v562, 0
        %v586 = vsel %vm566, %v563, 0
        %v589 = vsel %vm566, %v564, 0
        %591 = vmatpush.msra.mxu0 0.0
        %592 = vmatpush.msra.mxu0 0.0
        %593 = vmatpush.msra.mxu0 0.0
        %594 = vmatpush.msra.mxu0 0.0
        %595 = vmatpush.msra.mxu0 0.0
        %596 = vmatpush.msra.mxu0 0.0
        %597 = vmatpush.msra.mxu0 0.0
        %598 = vmatpush.msra.mxu0 0.0
        %599 = vmatpush.msra.mxu0 0.0
        %600 = vmatpush.msra.mxu0 0.0
        %601 = vmatpush.msra.mxu0 0.0
        %602 = vmatpush.msra.mxu0 0.0
        %603 = vmatpush.msra.mxu0 0.0
        %604 = vmatpush.msra.mxu0 0.0
        %605 = vmatpush.msra.mxu0 0.0
        %606 = vmatpush.msra.mxu0 %v565
        %607 = vmatmul.f32.gmra.mxu0 %v568
        %v608 = vpop.f32.mrf.mxu0
        %v609 = vadd.f32 0.0, %v608
        %610 = vmatmul.f32.gmra.mxu0 %v571
        %v611 = vpop.f32.mrf.mxu0
        %v612 = vadd.f32 0.0, %v611
        %613 = vmatmul.f32.gmra.mxu0 %v574
        %v614 = vpop.f32.mrf.mxu0
        %v615 = vadd.f32 0.0, %v614
        %616 = vmatmul.f32.gmra.mxu0 %v577
        %v617 = vpop.f32.mrf.mxu0
        %v618 = vadd.f32 0.0, %v617
        %619 = vmatmul.f32.gmra.mxu0 %v580
        %v620 = vpop.f32.mrf.mxu0
        %v621 = vadd.f32 0.0, %v620
        %622 = vmatmul.f32.gmra.mxu0 %v583
        %v623 = vpop.f32.mrf.mxu0
        %v624 = vadd.f32 0.0, %v623
        %625 = vmatmul.f32.gmra.mxu0 %v586
        %v626 = vpop.f32.mrf.mxu0
        %v627 = vadd.f32 0.0, %v626
        %628 = vmatmul.f32.gmra.mxu0 %v589
        %v629 = vpop.f32.mrf.mxu0
        %v630 = vadd.f32 0.0, %v629
        %631 = vdwg.mxu0
        %vm632 = vcmask 326656
        %v634 = vsel %vm632, %v517, 0
        %v637 = vsel %vm632, %v518, 0
        %v640 = vsel %vm632, %v519, 0
        %v643 = vsel %vm632, %v520, 0
        %v646 = vsel %vm632, %v521, 0
        %v649 = vsel %vm632, %v522, 0
        %v652 = vsel %vm632, %v523, 0
        %v655 = vsel %vm632, %v524, 0
        %657 = vmatpush.msra.mxu0 0.0
        %658 = vmatpush.msra.mxu0 0.0
        %659 = vmatpush.msra.mxu0 0.0
        %660 = vmatpush.msra.mxu0 0.0
        %661 = vmatpush.msra.mxu0 0.0
        %662 = vmatpush.msra.mxu0 0.0
        %663 = vmatpush.msra.mxu0 0.0
        %664 = vmatpush.msra.mxu0 0.0
        %665 = vmatpush.msra.mxu0 0.0
        %666 = vmatpush.msra.mxu0 0.0
        %667 = vmatpush.msra.mxu0 0.0
        %668 = vmatpush.msra.mxu0 %v425
        %669 = vmatpush.msra.mxu0 %v422
        %670 = vmatpush.msra.mxu0 %v419
        %671 = vmatpush.msra.mxu0 %v416
        %672 = vmatpush.msra.mxu0 %v413
        %673 = vmatmul.f32.gmra.mxu0 %v634
        %v674 = vpop.f32.mrf.mxu0
        %v675 = vadd.f32 %v609, %v674
        %676 = vmatmul.f32.gmra.mxu0 %v637
        %v677 = vpop.f32.mrf.mxu0
        %v678 = vadd.f32 %v612, %v677
        %679 = vmatmul.f32.gmra.mxu0 %v640
        %v680 = vpop.f32.mrf.mxu0
        %v681 = vadd.f32 %v615, %v680
        %682 = vmatmul.f32.gmra.mxu0 %v643
        %v683 = vpop.f32.mrf.mxu0
        %v684 = vadd.f32 %v618, %v683
        %685 = vmatmul.f32.gmra.mxu0 %v646
        %v686 = vpop.f32.mrf.mxu0
        %v687 = vadd.f32 %v621, %v686
        %688 = vmatmul.f32.gmra.mxu0 %v649
        %v689 = vpop.f32.mrf.mxu0
        %v690 = vadd.f32 %v624, %v689
        %691 = vmatmul.f32.gmra.mxu0 %v652
        %v692 = vpop.f32.mrf.mxu0
        %v693 = vadd.f32 %v627, %v692
        %694 = vmatmul.f32.gmra.mxu0 %v655
        %v695 = vpop.f32.mrf.mxu0
        %v696 = vadd.f32 %v630, %v695
        %697 = vdwg.mxu0
        %vm698 = vcmp.ge.f32.partialorder %v675, 0.0
        %vm699 = vcmp.ge.f32.partialorder %v678, 0.0
        %vm700 = vcmp.ge.f32.partialorder %v681, 0.0
        %vm701 = vcmp.ge.f32.partialorder %v684, 0.0
        %vm702 = vcmp.ge.f32.partialorder %v687, 0.0
        %vm703 = vcmp.ge.f32.partialorder %v690, 0.0
        %vm704 = vcmp.ge.f32.partialorder %v693, 0.0
        %vm705 = vcmp.ge.f32.partialorder %v696, 0.0
        %v706 = vmul.f32 %v675, 0.2
        %v707 = vmul.f32 %v678, 0.2
        %v708 = vmul.f32 %v681, 0.2
        %v709 = vmul.f32 %v684, 0.2
        %v710 = vmul.f32 %v687, 0.2
        %v711 = vmul.f32 %v690, 0.2
        %v712 = vmul.f32 %v693, 0.2
        %v713 = vmul.f32 %v696, 0.2
        %v714 = vsel %vm698, %v675, %v706
        %v715 = vsel %vm699, %v678, %v707
        %v716 = vsel %vm700, %v681, %v708
        %v717 = vsel %vm701, %v684, %v709
        %v718 = vsel %vm702, %v687, %v710
        %v719 = vsel %vm703, %v690, %v711
        %v720 = vsel %vm704, %v693, %v712
        %v721 = vsel %vm705, %v696, %v713
        %723 = vset.pattern.permute.xlu0 32
        %724 = vperm.xlu0 %723, %v714
        %v725 = vpop.permute.xlu0 %724
        %728 = vset.pattern.permute.xlu0 32
        %729 = vperm.xlu0 %728, %v715
        %v730 = vpop.permute.xlu0 %729
        %733 = vset.pattern.permute.xlu0 32
        %734 = vperm.xlu0 %733, %v716
        %v735 = vpop.permute.xlu0 %734
        %738 = vset.pattern.permute.xlu0 32
        %739 = vperm.xlu0 %738, %v717
        %v740 = vpop.permute.xlu0 %739
        %743 = vset.pattern.permute.xlu0 32
        %744 = vperm.xlu0 %743, %v718
        %v745 = vpop.permute.xlu0 %744
        %748 = vset.pattern.permute.xlu0 32
        %749 = vperm.xlu0 %748, %v719
        %v750 = vpop.permute.xlu0 %749
        %753 = vset.pattern.permute.xlu0 32
        %754 = vperm.xlu0 %753, %v720
        %v755 = vpop.permute.xlu0 %754
        %758 = vset.pattern.permute.xlu0 32
        %759 = vperm.xlu0 %758, %v721
        %v760 = vpop.permute.xlu0 %759
        %v762 = vsel %vm549, %v725, -1e+30
        %v763 = vsel %vm550, %v730, -1e+30
        %v764 = vsel %vm551, %v735, -1e+30
        %v765 = vsel %vm552, %v740, -1e+30
        %v766 = vsel %vm553, %v745, -1e+30
        %v767 = vsel %vm554, %v750, -1e+30
        %v768 = vsel %vm555, %v755, -1e+30
        %v769 = vsel %vm556, %v760, -1e+30
        %vm770 = vcmask 130048
        %v771 = vsel %vm770, %v762, -inf
        %v772 = vsel %vm770, %v763, -inf
        %v773 = vsel %vm770, %v764, -inf
        %v774 = vsel %vm770, %v765, -inf
        %v775 = vsel %vm770, %v766, -inf
        %v776 = vmax.f32 %v771, %v775
        %v777 = vsel %vm770, %v767, -inf
        %v778 = vmax.f32 %v772, %v777
        %v779 = vsel %vm770, %v768, -inf
        %v780 = vmax.f32 %v773, %v779
        %v781 = vsel %vm770, %v769, -inf
        %v782 = vmax.f32 %v774, %v781
        %v783 = vmax.f32 %v776, %v778
        %v784 = vmax.f32 %v780, %v782
        %v785 = vmax.f32 %v783, %v784
        %v786 = vrot.slane %v785, 4
        %v787 = vmax.f32 %v785, %v786
        %v788 = vrot.slane %v787, 2
        %v789 = vmax.f32 %v787, %v788
        %v790 = vrot.slane %v789, 1
        %v791 = vmax.f32 %v789, %v790
        %v792 = vsel %vm549, %v791, -1e+30
        %v793 = vsel %vm550, %v791, -1e+30
        %v794 = vsel %vm551, %v791, -1e+30
        %v795 = vsel %vm552, %v791, -1e+30
        %v796 = vsel %vm553, %v791, -1e+30
        %v797 = vsel %vm554, %v791, -1e+30
        %v798 = vsel %vm555, %v791, -1e+30
        %v799 = vsel %vm556, %v791, -1e+30
        %v800 = vsel %vm770, %v792, -inf
        %801 = vmax.xlane.f32.xlu0 %v800
        %v802 = vpop.xlane.xlu0 %801
        %v803 = vsel %vm770, %v793, -inf
        %804 = vmax.xlane.f32.xlu0 %v803
        %v805 = vpop.xlane.xlu0 %804
        %v806 = vsel %vm770, %v794, -inf
        %807 = vmax.xlane.f32.xlu0 %v806
        %v808 = vpop.xlane.xlu0 %807
        %v809 = vsel %vm770, %v795, -inf
        %810 = vmax.xlane.f32.xlu0 %v809
        %v811 = vpop.xlane.xlu0 %810
        %v812 = vsel %vm770, %v796, -inf
        %813 = vmax.xlane.f32.xlu0 %v812
        %v814 = vpop.xlane.xlu0 %813
        %v815 = vsel %vm770, %v797, -inf
        %816 = vmax.xlane.f32.xlu0 %v815
        %v817 = vpop.xlane.xlu0 %816
        %v818 = vsel %vm770, %v798, -inf
        %819 = vmax.xlane.f32.xlu0 %v818
        %v820 = vpop.xlane.xlu0 %819
        %v821 = vsel %vm770, %v799, -inf
        %822 = vmax.xlane.f32.xlu0 %v821
        %v823 = vpop.xlane.xlu0 %822
        %v824 = vsub.f32 %v714, %v802
        %v825 = vsub.f32 %v715, %v805
        %v826 = vsub.f32 %v716, %v808
        %v827 = vsub.f32 %v717, %v811
        %v828 = vsub.f32 %v718, %v814
        %v829 = vsub.f32 %v719, %v817
        %v830 = vsub.f32 %v720, %v820
        %v831 = vsub.f32 %v721, %v823
        %v832 = vmul.f32 %v824, 1.442695
        %v833 = vpow.pop %v832
        %v834 = vmul.f32 %v825, 1.442695
        %v835 = vpow.pop %v834
        %v836 = vmul.f32 %v826, 1.442695
        %v837 = vpow.pop %v836
        %v838 = vmul.f32 %v827, 1.442695
        %v839 = vpow.pop %v838
        %v840 = vmul.f32 %v828, 1.442695
        %v841 = vpow.pop %v840
        %v842 = vmul.f32 %v829, 1.442695
        %v843 = vpow.pop %v842
        %v844 = vmul.f32 %v830, 1.442695
        %v845 = vpow.pop %v844
        %v846 = vmul.f32 %v831, 1.442695
        %v847 = vpow.pop %v846
        %vm848 = vcmp.eq.s32.totalorder %v428, 32
        %v849 = vsel %vm848, 1.0, %v675
        %v850 = vsel %vm848, 1.0, %v678
        %v851 = vsel %vm848, 1.0, %v681
        %v852 = vsel %vm848, 1.0, %v684
        %v853 = vsel %vm848, 1.0, %v687
        %v854 = vsel %vm848, 1.0, %v690
        %v855 = vsel %vm848, 1.0, %v693
        %v856 = vsel %vm848, 1.0, %v696
        %858 = vset.pattern.permute.xlu0 32
        %859 = vperm.xlu0 %858, %v833
        %v860 = vpop.permute.xlu0 %859
        %863 = vset.pattern.permute.xlu0 32
        %864 = vperm.xlu0 %863, %v835
        %v865 = vpop.permute.xlu0 %864
        %868 = vset.pattern.permute.xlu0 32
        %869 = vperm.xlu0 %868, %v837
        %v870 = vpop.permute.xlu0 %869
        %873 = vset.pattern.permute.xlu0 32
        %874 = vperm.xlu0 %873, %v839
        %v875 = vpop.permute.xlu0 %874
        %878 = vset.pattern.permute.xlu0 32
        %879 = vperm.xlu0 %878, %v841
        %v880 = vpop.permute.xlu0 %879
        %883 = vset.pattern.permute.xlu0 32
        %884 = vperm.xlu0 %883, %v843
        %v885 = vpop.permute.xlu0 %884
        %888 = vset.pattern.permute.xlu0 32
        %889 = vperm.xlu0 %888, %v845
        %v890 = vpop.permute.xlu0 %889
        %893 = vset.pattern.permute.xlu0 32
        %894 = vperm.xlu0 %893, %v847
        %v895 = vpop.permute.xlu0 %894
        %v897 = vmul.f32 %v860, %v849
        %v898 = vmul.f32 %v865, %v850
        %v899 = vmul.f32 %v870, %v851
        %v900 = vmul.f32 %v875, %v852
        %v901 = vmul.f32 %v880, %v853
        %v902 = vmul.f32 %v885, %v854
        %v903 = vmul.f32 %v890, %v855
        %v904 = vmul.f32 %v895, %v856
        %v905 = vlaneseq
        %v906 = vshrl.u32 %v905, 7
        %v907 = vadd.s32 %v906, 8
        %v908 = vperm.slane %v367, 0
        %vm909 = vcmp.eq.s32.totalorder %v906, %v908
        %vm910 = vcmp.eq.s32.totalorder %v907, %v908
        %v911 = vsel %vm909, 1, 0
        %v912 = vsel %vm910, 1, 0
        %v913 = vcvt.s32.f32 %v911
        %v914 = vcvt.s32.f32 %v912
        %vm915 = vcmask 523264
        %v917 = vsel %vm915, %v913, 0
        %v920 = vsel %vm915, %v914, 0
        %922 = vmatpush.msra.mxu0 0.0
        %923 = vmatpush.msra.mxu0 0.0
        %924 = vmatpush.msra.mxu0 0.0
        %925 = vmatpush.msra.mxu0 0.0
        %926 = vmatpush.msra.mxu0 0.0
        %927 = vmatpush.msra.mxu0 0.0
        %928 = vmatpush.msra.mxu0 0.0
        %929 = vmatpush.msra.mxu0 0.0
        %930 = vmatpush.msra.mxu0 %v904
        %931 = vmatpush.msra.mxu0 %v903
        %932 = vmatpush.msra.mxu0 %v902
        %933 = vmatpush.msra.mxu0 %v901
        %934 = vmatpush.msra.mxu0 %v900
        %935 = vmatpush.msra.mxu0 %v899
        %936 = vmatpush.msra.mxu0 %v898
        %937 = vmatpush.msra.mxu0 %v897
        %938 = vmatmul.f32.gmra.mxu0 %v917
        %v939 = vpop.f32.mrf.mxu0
        %v940 = vadd.f32 0.0, %v939
        %941 = vmatmul.f32.gmra.mxu0 %v920
        %v942 = vpop.f32.mrf.mxu0
        %v943 = vadd.f32 0.0, %v942
        %944 = vdwg.mxu0
        %vm945 = vcmp.gt.f32.partialorder %v940, 0.0
        %vm946 = vcmp.gt.f32.partialorder %v943, 0.0
        %v947 = vsel %vm945, %v940, 1.0
        %v948 = vsel %vm946, %v943, 1.0
        %950 = vset.pattern.permute.xlu0 32
        %951 = vperm.xlu0 %950, %v947
        %v952 = vpop.permute.xlu0 %951
        %955 = vset.pattern.permute.xlu0 32
        %956 = vperm.xlu0 %955, %v948
        %v957 = vpop.permute.xlu0 %956
        %v959 = vrcp.pop %v952
        %v960 = vmul.f32 %v952, %v959
        %v961 = vsub.f32 1.0, %v960
        %v962 = vmul.f32 %v959, %v961
        %v963 = vadd.f32 %v959, %v962
        %vm964 = vweird.f32 %v952
        %vm965 = vweird.f32 %v959
        %vm966 = vmor %vm964, %vm965
        %v967 = vsel %vm966, %v959, %v963
        %v968 = vand.u32 2147483647, %v952
        %vm969 = vcmp.eq.f32.partialorder %v968, 8.507059e+37
        %v970 = vand.u32 %v952, 2147483648
        %v971 = vor.u32 1.1754944e-38, %v970
        %v972 = vsel %vm969, %v971, %v967
        %v973 = vmul.f32 %v940, %v972
        %v974 = vrcp.pop %v957
        %v975 = vmul.f32 %v957, %v974
        %v976 = vsub.f32 1.0, %v975
        %v977 = vmul.f32 %v974, %v976
        %v978 = vadd.f32 %v974, %v977
        %vm979 = vweird.f32 %v957
        %vm980 = vweird.f32 %v974
        %vm981 = vmor %vm979, %vm980
        %v982 = vsel %vm981, %v974, %v978
        %v983 = vand.u32 2147483647, %v957
        %vm984 = vcmp.eq.f32.partialorder %v983, 8.507059e+37
        %v985 = vand.u32 %v957, 2147483648
        %v986 = vor.u32 1.1754944e-38, %v985
        %v987 = vsel %vm984, %v986, %v982
        %v988 = vmul.f32 %v943, %v987
        %v989 = vmax.f32 %v973, 0.0
        %v990 = vmax.f32 %v988, 0.0
        %991 = vst [vmem:[%s327] sm:$0xff] %v989
        %992 = vst [vmem:[%s327 + $0x8] sm:$0xff] %v990
        %s993 = sand.u32 %s201, 1
        %s994 = scalar_lea.sflag [#allocation3], %s993
        %s995 = sand.u32 %s201, 1
        %s996 = smul.addr %s995, 16
        %s997 = scalar_lea.vmem [#allocation2], %s996
        // Predicated region
        $region49: #{tpu_custom_call.1} parent=47 // pred_check
          %p998 = pneg %p211
        $region50: #{tpu_custom_call.1} parent=47 // pred_check_branch
          %1000 = sbr.rel (%p998) target = $region52
        $region51: #{tpu_custom_call.1} parent=47 // pred_region
          %1002 = vsyncadd %s994, 0
          %s1003 = smul.addr %s21, 2
          %s1004 = smul.addr %s1003, 8
          %s1005 = scalar_lea.hbm %s7, %s1004
          %s1006 = sshll.u32 %s997, 4
          %s1007 = int_to_ptr.vmem [resolvable:$true] %s1006
          %s1008 = sshll.u32 %s1005, 4
          %s1009 = int_to_ptr.hbm [resolvable:$true] %s1008
          %1014 = dma.vmem_to_hbm [thread:$0]  %s1007, 256, %s1009, %s994, 128, 128, 8
        $region52: #{tpu_custom_call.1} parent=47 // pred_fallthru
          _
      $region48: #{tpu_custom_call.1} parent=5 // pred_fallthru
        _
      %p1015 = scmp.le.s32.totalorder 2, %s16
      // Predicated region
      $region53: #{tpu_custom_call.1} parent=5 // pred_check
        %p1016 = pneg %p1015
      $region54: #{tpu_custom_call.1} parent=5 // pred_check_branch
        %1018 = sbr.rel (%p1016) target = $region56
      $region55: #{tpu_custom_call.1} parent=5 // pred_region
        %s1019 = ssub.s32 %s16, 2
        // Predicated region
        $region57: #{tpu_custom_call.1} parent=55 // pred_check
          %p1020 = pneg %p217
        $region58: #{tpu_custom_call.1} parent=55 // pred_check_branch
          %1022 = sbr.rel (%p1020) target = $region60
        $region59: #{tpu_custom_call.1} parent=55 // pred_region
          %s1023 = sand.u32 %s202, 1
          %s1024 = scalar_lea.sflag [#allocation3], %s1023
          %s1025 = sand.u32 %s202, 1
          %s1026 = smul.addr %s1025, 16
          %s1027 = scalar_lea.vmem [#allocation2], %s1026
          %1029 = dma.done %s1024, 256
        $region60: #{tpu_custom_call.1} parent=55 // pred_fallthru
          _
      $region56: #{tpu_custom_call.1} parent=5 // pred_fallthru
        _
    $region6: #{tpu_custom_call.1} parent=1 // loop_footer
      %s20 = sadd.s32 1, %s16
    $region7: #{tpu_custom_call.1} parent=1 // loop_footer_branch
      %15 = sbr.rel target = $region3
    $region8: #{tpu_custom_call.1} parent=1 // loop_exit
      _
    %1030 = vsyncpa [#allocation3], 1
    %s1031 = scalar_lea.sflag [#allocation3], 1
    %1032 = vsyncpa %s1031, 1

</llo_original>
